<compile_context>
chip_gen: v7x
topology: tpu7x:2x2x1
jax: 0.10.0
libtpu: 0.0.40
codegen_flags: <defaults>
</compile_context>

<pallas_src>
import jax
import jax.numpy as jnp
from jax.experimental import pallas as pl
from jax.experimental.pallas import tpu as pltpu


IN_DIM = 5
HIDDEN = 50
OUT_DIM = 2

# Large batch tile (lanes) amortizes per-grid-step overhead; small enough
# (~0.5 MiB double-buffered) to fit every generation's scoped VMEM default.
MAX_TILE_B = 8192


def _round_up(x, m):
    return (x + m - 1) // m * m


def mlp_kernel(x_ref, w1_ref, b1_ref, w2_ref, b2_ref, o_ref):
    # x_ref : (5, TILE_B)      batch on lanes
    # w1_ref: (50, 5)          PyTorch fc1.weight layout
    # b1_ref: (50, 1)
    # w2_ref: (2, 50)          PyTorch out.weight layout
    # b2_ref: (2, 1)
    # o_ref : (2, TILE_B)
    h = jnp.dot(w1_ref[...], x_ref[...], preferred_element_type=jnp.float32)
    h = jnp.maximum(h + b1_ref[...], 0.0)
    o = jnp.dot(w2_ref[...], h, preferred_element_type=jnp.float32)
    o_ref[...] = (o + b2_ref[...]).astype(o_ref.dtype)


def net_5dim_forward(x, w1, b1, w2, b2, *, tile_b=None):
    """Forward pass of Net_5dim.

    x : (B, 5) float32
    w1: (50, 5)  fc1.weight      b1: (50,) fc1.bias
    w2: (2, 50)  out.weight      b2: (2,)  out.bias
    returns (B, 2)
    """
    B = x.shape[0]
    if tile_b is None:
        tile_b = min(MAX_TILE_B, _round_up(max(B, 1), 128))
    b_pad = _round_up(max(B, 1), tile_b)
    n_tiles = b_pad // tile_b

    # Pad batch to a multiple of the tile and transpose: batch -> lanes.
    x_t = jnp.pad(x, ((0, b_pad - B), (0, 0))).T          # (5, b_pad)
    b1_c = b1.reshape(HIDDEN, 1)
    b2_c = b2.reshape(OUT_DIM, 1)

    out_t = pl.pallas_call(
        mlp_kernel,
        out_shape=jax.ShapeDtypeStruct((OUT_DIM, b_pad), jnp.float32),
        grid=(n_tiles,),
        in_specs=[
            # Streamed per grid step (pipelined).
            pl.BlockSpec((IN_DIM, tile_b), lambda i: (0, i)),
            # Tiny weights / biases: same block every step -> stay resident.
            pl.BlockSpec((HIDDEN, IN_DIM), lambda i: (0, 0)),
            pl.BlockSpec((HIDDEN, 1), lambda i: (0, 0)),
            pl.BlockSpec((OUT_DIM, HIDDEN), lambda i: (0, 0)),
            pl.BlockSpec((OUT_DIM, 1), lambda i: (0, 0)),
        ],
        out_specs=pl.BlockSpec((OUT_DIM, tile_b), lambda i: (0, i)),
        compiler_params=pltpu.CompilerParams(
            dimension_semantics=("parallel",),
        ),
    )(x_t, w1, b1_c, w2, b2_c)

    return out_t.T[:B, :]                                   # (B, 2)


def init_params(key):
    """Parameter init matching the PyTorch module.

    fc1.weight ~ N(0, 0.1)                      shape (50, 5)
    fc1.bias   ~ U(-1/sqrt(5), 1/sqrt(5))       shape (50,)
    out.weight ~ N(0, 0.1)                      shape (2, 50)
    out.bias   ~ U(-1/sqrt(50), 1/sqrt(50))     shape (2,)
    """
    k1, k2, k3, k4 = jax.random.split(key, 4)
    w1 = 0.1 * jax.random.normal(k1, (HIDDEN, IN_DIM), dtype=jnp.float32)
    b1 = jax.random.uniform(
        k2, (HIDDEN,), dtype=jnp.float32,
        minval=-1.0 / jnp.sqrt(float(IN_DIM)),
        maxval=1.0 / jnp.sqrt(float(IN_DIM)))
    w2 = 0.1 * jax.random.normal(k3, (OUT_DIM, HIDDEN), dtype=jnp.float32)
    b2 = jax.random.uniform(
        k4, (OUT_DIM,), dtype=jnp.float32,
        minval=-1.0 / jnp.sqrt(float(HIDDEN)),
        maxval=1.0 / jnp.sqrt(float(HIDDEN)))
    return w1, b1, w2, b2


def reference_forward(x, w1, b1, w2, b2):
    h = jnp.maximum(x @ w1.T + b1, 0.0)
    return h @ w2.T + b2


if __name__ == "__main__":
    key = jax.random.PRNGKey(0)
    kx, kp = jax.random.split(key)

    batch = 8
    x = jax.random.normal(kx, (batch, IN_DIM), dtype=jnp.float32)
    w1, b1, w2, b2 = init_params(kp)

    out = net_5dim_forward(x, w1, b1, w2, b2)
    out = jax.block_until_ready(out)

    ref = reference_forward(x, w1, b1, w2, b2)
    assert out.shape == (batch, OUT_DIM), out.shape
    assert jnp.allclose(out, ref, atol=1e-5, rtol=1e-5), "mismatch vs reference"

    # Also sanity-check a multi-tile batch so the grid path is exercised.
    big_b = 2 * 128 + 7
    xb = jax.random.normal(kx, (big_b, IN_DIM), dtype=jnp.float32)
    out_b = jax.block_until_ready(net_5dim_forward(xb, w1, b1, w2, b2, tile_b=128))
    assert jnp.allclose(out_b, reference_forward(xb, w1, b1, w2, b2),
                        atol=1e-5, rtol=1e-5), "mismatch vs reference (tiled)"

    print("KERNEL_OK")
</pallas_src>

<mosaic_0001>
module attributes {stable_mosaic.version = 11 : i64} {
  func.func @mlp_kernel(%arg0: i32, %arg1: memref<5x128xf32, #tpu.memory_space<vmem>>, %arg2: memref<50x5xf32, #tpu.memory_space<vmem>>, %arg3: memref<50x1xf32, #tpu.memory_space<vmem>>, %arg4: memref<2x50xf32, #tpu.memory_space<vmem>>, %arg5: memref<2x1xf32, #tpu.memory_space<vmem>>, %arg6: memref<2x128xf32, #tpu.memory_space<vmem>>) attributes {dimension_semantics = [#tpu.dimension_semantics<parallel>], iteration_bounds = array<i64: 1>, scalar_prefetch = 0 : i64, scratch_operands = 0 : i64, tpu.core_type = #tpu.core_type<tc>, window_params = [{transform_indices = @transform_0, window_bounds = array<i64: 5, 128>}, {pipeline_mode = #tpu.pipeline_mode<synchronous>, transform_indices = @transform_1, window_bounds = array<i64: 50, 5>}, {pipeline_mode = #tpu.pipeline_mode<synchronous>, transform_indices = @transform_2, window_bounds = array<i64: 50, 1>}, {pipeline_mode = #tpu.pipeline_mode<synchronous>, transform_indices = @transform_3, window_bounds = array<i64: 2, 50>}, {pipeline_mode = #tpu.pipeline_mode<synchronous>, transform_indices = @transform_4, window_bounds = array<i64: 2, 1>}, {transform_indices = @transform_5, window_bounds = array<i64: 2, 128>}]} {
    %c0 = arith.constant 0 : index
    %c0_0 = arith.constant 0 : index
    %0 = vector.load %arg2[%c0, %c0_0] : memref<50x5xf32, #tpu.memory_space<vmem>>, vector<50x5xf32>
    %c0_1 = arith.constant 0 : index
    %c0_2 = arith.constant 0 : index
    %1 = vector.load %arg1[%c0_1, %c0_2] : memref<5x128xf32, #tpu.memory_space<vmem>>, vector<5x128xf32>
    %cst = arith.constant dense<0.000000e+00> : vector<50x128xf32>
    %2 = tpu.matmul %0, %1, %cst {dimension_numbers = #tpu.dot_dimension_numbers<[1], [0], [0], [1], [0, 0, 1, 1], [], []>} : vector<50x5xf32>, vector<5x128xf32>, vector<50x128xf32> -> vector<50x128xf32>
    %c0_3 = arith.constant 0 : index
    %c0_4 = arith.constant 0 : index
    %3 = vector.load %arg3[%c0_3, %c0_4] : memref<50x1xf32, #tpu.memory_space<vmem>>, vector<50x1xf32>
    %4 = vector.broadcast %3 : vector<50x1xf32> to vector<50x128xf32>
    %5 = arith.addf %2, %4 : vector<50x128xf32>
    %cst_5 = arith.constant 0.000000e+00 : f32
    %6 = vector.broadcast %cst_5 : f32 to vector<50x128xf32>
    %7 = arith.maximumf %5, %6 : vector<50x128xf32>
    %c0_6 = arith.constant 0 : index
    %c0_7 = arith.constant 0 : index
    %8 = vector.load %arg4[%c0_6, %c0_7] : memref<2x50xf32, #tpu.memory_space<vmem>>, vector<2x50xf32>
    %cst_8 = arith.constant dense<0.000000e+00> : vector<2x128xf32>
    %9 = tpu.matmul %8, %7, %cst_8 {dimension_numbers = #tpu.dot_dimension_numbers<[1], [0], [0], [1], [0, 0, 1, 1], [], []>} : vector<2x50xf32>, vector<50x128xf32>, vector<2x128xf32> -> vector<2x128xf32>
    %c0_9 = arith.constant 0 : index
    %c0_10 = arith.constant 0 : index
    %10 = vector.load %arg5[%c0_9, %c0_10] : memref<2x1xf32, #tpu.memory_space<vmem>>, vector<2x1xf32>
    %11 = vector.broadcast %10 : vector<2x1xf32> to vector<2x128xf32>
    %12 = arith.addf %9, %11 : vector<2x128xf32>
    %c0_11 = arith.constant 0 : index
    %c0_12 = arith.constant 0 : index
    %13 = vector.load %arg6[%c0_11, %c0_12] : memref<2x128xf32, #tpu.memory_space<vmem>>, vector<2x128xf32>
    tpu.vector_store %arg6[%c0_11, %c0_12], %12 {strides = array<i32>} : memref<2x128xf32, #tpu.memory_space<vmem>>, vector<2x128xf32>,
    return
  }
  func.func @transform_0(%arg0: i32) -> (i32, i32) {
    %c0_i32 = arith.constant 0 : i32
    %c0_i32_0 = arith.constant 0 : i32
    return %c0_i32, %arg0 : i32, i32
  }
  func.func @transform_1(%arg0: i32) -> (i32, i32) {
    %c0_i32 = arith.constant 0 : i32
    %c0_i32_0 = arith.constant 0 : i32
    %c0_i32_1 = arith.constant 0 : i32
    return %c0_i32, %c0_i32_0 : i32, i32
  }
  func.func @transform_2(%arg0: i32) -> (i32, i32) {
    %c0_i32 = arith.constant 0 : i32
    %c0_i32_0 = arith.constant 0 : i32
    %c0_i32_1 = arith.constant 0 : i32
    return %c0_i32, %c0_i32_0 : i32, i32
  }
  func.func @transform_3(%arg0: i32) -> (i32, i32) {
    %c0_i32 = arith.constant 0 : i32
    %c0_i32_0 = arith.constant 0 : i32
    %c0_i32_1 = arith.constant 0 : i32
    return %c0_i32, %c0_i32_0 : i32, i32
  }
  func.func @transform_4(%arg0: i32) -> (i32, i32) {
    %c0_i32 = arith.constant 0 : i32
    %c0_i32_0 = arith.constant 0 : i32
    %c0_i32_1 = arith.constant 0 : i32
    return %c0_i32, %c0_i32_0 : i32, i32
  }
  func.func @transform_5(%arg0: i32) -> (i32, i32) {
    %c0_i32 = arith.constant 0 : i32
    %c0_i32_0 = arith.constant 0 : i32
    return %c0_i32, %arg0 : i32, i32
  }
}

</mosaic_0001>

<llo_original>
// kernel: tpu_custom_call.1
$region0: #{tpu_custom_call.1}
  #allocation0 [shape = 'u32[]', space=smem, size = 0x4, offset = 0x4, fixed_abs, tag = 'smem constant byte address 0x4 - core index']
  #allocation1 [shape = 'u32[144,128]{1,0:T(1,128)}', space=vmem, size = 0x12000, scoped, tag = 'internal scratch']
  %s0 = inlined_call_operand.vmem [shape: f32[5,128], index: 0, kind: input, shape index: {}]
  %s1 = inlined_call_operand.vmem [shape: f32[50,5], index: 1, kind: input, shape index: {}]
  %s2 = inlined_call_operand.vmem [shape: f32[50,1], index: 2, kind: input, shape index: {}]
  %s3 = inlined_call_operand.vmem [shape: f32[2,50], index: 3, kind: input, shape index: {}]
  %s4 = inlined_call_operand.vmem [shape: f32[2,1], index: 4, kind: input, shape index: {}]
  %s5 = inlined_call_operand.hbm [shape: f32[2,128], index: 5, kind: output, shape index: {}]
  %s6 = sld [smem:[#allocation0]]
  $region30: #{tpu_custom_call.1} parent=0
    _
  %s8 = ssub.s32 1, %s6
  %s9 = scalar_select 0, %s8, %s6
  $region1: #{tpu_custom_call.1} parent=0
    #allocation2 [shape = 'u8[1024]{0}', space=vmem, size = 0x400, scoped, tag = 'output window, operand 0, single buffered']
    #allocation3 [shape = 's32[1]{0}', space=sflag, size = 0x4, scoped, tag = 'scoped memory for tpu_custom_call.1']
    %10 = vsyncpa [#allocation3], 0
    // Predicated region
    $region2: #{tpu_custom_call.1} parent=1 // pred_check
      _
    $region3: #{tpu_custom_call.1} parent=1 // pred_check_branch
      %12 = sbr.rel (0) target = $region5
    $region4: #{tpu_custom_call.1} parent=1 // pred_region
      _
    $region5: #{tpu_custom_call.1} parent=1 // pred_fallthru
      _
    // Predicated region
    $region6: #{tpu_custom_call.1} parent=1 // pred_check
      _
    $region7: #{tpu_custom_call.1} parent=1 // pred_check_branch
      %14 = sbr.rel (0) target = $region9
    $region8: #{tpu_custom_call.1} parent=1 // pred_region
      _
    $region9: #{tpu_custom_call.1} parent=1 // pred_fallthru
      _
    // Predicated region
    $region10: #{tpu_custom_call.1} parent=1 // pred_check
      _
    $region11: #{tpu_custom_call.1} parent=1 // pred_check_branch
      %16 = sbr.rel (0) target = $region13
    $region12: #{tpu_custom_call.1} parent=1 // pred_region
      _
    $region13: #{tpu_custom_call.1} parent=1 // pred_fallthru
      _
    // Predicated region
    $region14: #{tpu_custom_call.1} parent=1 // pred_check
      _
    $region15: #{tpu_custom_call.1} parent=1 // pred_check_branch
      %18 = sbr.rel (0) target = $region17
    $region16: #{tpu_custom_call.1} parent=1 // pred_region
      _
    $region17: #{tpu_custom_call.1} parent=1 // pred_fallthru
      _
    // Predicated region
    $region18: #{tpu_custom_call.1} parent=1 // pred_check
      _
    $region19: #{tpu_custom_call.1} parent=1 // pred_check_branch
      %20 = sbr.rel (0) target = $region21
    $region20: #{tpu_custom_call.1} parent=1 // pred_region
      _
    $region21: #{tpu_custom_call.1} parent=1 // pred_fallthru
      _
    %v21 = vld [vmem:[%s1] sm:$0xff]
    %v22 = vld [vmem:[%s1 + $0x8] sm:$0xff]
    %v23 = vld [vmem:[%s1 + $0x10] sm:$0xff]
    %v24 = vld [vmem:[%s1 + $0x18] sm:$0xff]
    %v25 = vld [vmem:[%s1 + $0x20] sm:$0xff]
    %v26 = vld [vmem:[%s1 + $0x28] sm:$0xff]
    %v27 = vld [vmem:[%s1 + $0x30] sm:$0x3]
    %v28 = vld [vmem:[%s0] sm:$0x1f]
    %v29 = vld [vmem:[%s2] sm:$0xff]
    %v30 = vld [vmem:[%s2 + $0x8] sm:$0xff]
    %v31 = vld [vmem:[%s2 + $0x10] sm:$0xff]
    %v32 = vld [vmem:[%s2 + $0x18] sm:$0xff]
    %v33 = vld [vmem:[%s2 + $0x20] sm:$0xff]
    %v34 = vld [vmem:[%s2 + $0x28] sm:$0xff]
    %v35 = vld [vmem:[%s2 + $0x30] sm:$0x3]
    %37 = vset.pattern.permute.xlu0 0
    %38 = vperm.xlu0 %37, %v29
    %v39 = vpop.permute.xlu0 %38
    %42 = vset.pattern.permute.xlu0 0
    %43 = vperm.xlu0 %42, %v30
    %v44 = vpop.permute.xlu0 %43
    %47 = vset.pattern.permute.xlu0 0
    %48 = vperm.xlu0 %47, %v31
    %v49 = vpop.permute.xlu0 %48
    %52 = vset.pattern.permute.xlu0 0
    %53 = vperm.xlu0 %52, %v32
    %v54 = vpop.permute.xlu0 %53
    %57 = vset.pattern.permute.xlu0 0
    %58 = vperm.xlu0 %57, %v33
    %v59 = vpop.permute.xlu0 %58
    %62 = vset.pattern.permute.xlu0 0
    %63 = vperm.xlu0 %62, %v34
    %v64 = vpop.permute.xlu0 %63
    %67 = vset.pattern.permute.xlu0 0
    %68 = vperm.xlu0 %67, %v35
    %v69 = vpop.permute.xlu0 %68
    %vm71 = vcmask 39936
    %v73 = vsel %vm71, %v21, 0
    %v76 = vsel %vm71, %v22, 0
    %v79 = vsel %vm71, %v23, 0
    %v82 = vsel %vm71, %v24, 0
    %v85 = vsel %vm71, %v25, 0
    %v88 = vsel %vm71, %v26, 0
    %v91 = vsel %vm71, %v27, 0
    %vm93 = vcmask 1044480
    %v95 = vsel %vm93, %v28, 0
    %97 = vmatprep.subr.mxu0 0.0
    %98 = vmatpush1.msra.mxu0 %v95
    %99 = vmatprep.subr.mxu0 0.0
    %100 = vmatpush1.msra.mxu0 0.0
    %101 = vmatprep.subr.mxu0 0.0
    %102 = vmatpush1.msra.mxu0 0.0
    %103 = vmatprep.subr.mxu0 0.0
    %104 = vmatpush1.msra.mxu0 0.0
    %105 = vmatprep.subr.mxu0 0.0
    %106 = vmatpush1.msra.mxu0 0.0
    %107 = vmatprep.subr.mxu0 0.0
    %108 = vmatpush1.msra.mxu0 0.0
    %109 = vmatprep.subr.mxu0 0.0
    %110 = vmatpush1.msra.mxu0 0.0
    %111 = vmatprep.subr.mxu0 0.0
    %112 = vmatpush1.msra.mxu0 0.0
    %113 = vmatprep.subr.mxu0 0.0
    %114 = vmatpush1.msra.mxu0 0.0
    %115 = vmatprep.subr.mxu0 0.0
    %116 = vmatpush1.msra.mxu0 0.0
    %117 = vmatprep.subr.mxu0 0.0
    %118 = vmatpush1.msra.mxu0 0.0
    %119 = vmatprep.subr.mxu0 0.0
    %120 = vmatpush1.msra.mxu0 0.0
    %121 = vmatprep.subr.mxu0 0.0
    %122 = vmatpush1.msra.mxu0 0.0
    %123 = vmatprep.subr.mxu0 0.0
    %124 = vmatpush1.msra.mxu0 0.0
    %125 = vmatprep.subr.mxu0 0.0
    %126 = vmatpush1.msra.mxu0 0.0
    %127 = vmatprep.subr.mxu0 0.0
    %128 = vmatpush1.msra.mxu0 0.0
    %129 = vmatprep.subr.mxu0 0.0
    %130 = vmatpush1.msra.mxu0 0.0
    %131 = vmatprep.subr.mxu0 0.0
    %132 = vmatpush1.msra.mxu0 0.0
    %133 = vmatprep.subr.mxu0 0.0
    %134 = vmatpush1.msra.mxu0 0.0
    %135 = vmatprep.subr.mxu0 0.0
    %136 = vmatpush1.msra.mxu0 0.0
    %137 = vmatprep.subr.mxu0 0.0
    %138 = vmatpush1.msra.mxu0 0.0
    %139 = vmatprep.subr.mxu0 0.0
    %140 = vmatpush1.msra.mxu0 0.0
    %141 = vmatprep.subr.mxu0 0.0
    %142 = vmatpush1.msra.mxu0 0.0
    %143 = vmatprep.subr.mxu0 0.0
    %144 = vmatpush1.msra.mxu0 0.0
    %145 = vmatprep.subr.mxu0 0.0
    %146 = vmatpush1.msra.mxu0 0.0
    %147 = vmatprep.subr.mxu0 0.0
    %148 = vmatpush1.msra.mxu0 0.0
    %149 = vmatprep.subr.mxu0 0.0
    %150 = vmatpush1.msra.mxu0 0.0
    %151 = vmatprep.subr.mxu0 0.0
    %152 = vmatpush1.msra.mxu0 0.0
    %153 = vmatprep.subr.mxu0 0.0
    %154 = vmatpush1.msra.mxu0 0.0
    %155 = vmatprep.subr.mxu0 0.0
    %156 = vmatpush1.msra.mxu0 0.0
    %157 = vmatprep.subr.mxu0 0.0
    %158 = vmatpush1.msra.mxu0 0.0
    %159 = vmatprep.subr.mxu0 0.0
    %160 = vmatpush1.msra.mxu0 0.0
    %161 = vmatprep.mubr.f32.mxu0 0.0
    %162 = vmatmul.mubr.f32.gmra.mrb[0].mxu0 %v73
    %v163 = vpop.f32.mrb[0].mxu0
    %v164 = vadd.f32 %v39, %v163
    %v165 = vpop.f32.mrb[0].mxu0
    %166 = vmatprep.mubr.f32.mxu0 0.0
    %167 = vmatmul.mubr.f32.gmra.mrb[0].mxu0 %v76
    %v168 = vpop.f32.mrb[0].mxu0
    %v169 = vadd.f32 %v44, %v168
    %v170 = vpop.f32.mrb[0].mxu0
    %171 = vmatprep.mubr.f32.mxu0 0.0
    %172 = vmatmul.mubr.f32.gmra.mrb[0].mxu0 %v79
    %v173 = vpop.f32.mrb[0].mxu0
    %v174 = vadd.f32 %v49, %v173
    %v175 = vpop.f32.mrb[0].mxu0
    %176 = vmatprep.mubr.f32.mxu0 0.0
    %177 = vmatmul.mubr.f32.gmra.mrb[0].mxu0 %v82
    %v178 = vpop.f32.mrb[0].mxu0
    %v179 = vadd.f32 %v54, %v178
    %v180 = vpop.f32.mrb[0].mxu0
    %181 = vmatprep.mubr.f32.mxu0 0.0
    %182 = vmatmul.mubr.f32.gmra.mrb[0].mxu0 %v85
    %v183 = vpop.f32.mrb[0].mxu0
    %v184 = vadd.f32 %v59, %v183
    %v185 = vpop.f32.mrb[0].mxu0
    %186 = vmatprep.mubr.f32.mxu0 0.0
    %187 = vmatmul.mubr.f32.gmra.mrb[0].mxu0 %v88
    %v188 = vpop.f32.mrb[0].mxu0
    %v189 = vadd.f32 %v64, %v188
    %v190 = vpop.f32.mrb[0].mxu0
    %191 = vmatprep.mubr.f32.mxu0 0.0
    %192 = vmatmul.mubr.f32.gmra.mrb[0].mxu0 %v91
    %v193 = vpop.f32.mrb[0].mxu0
    %v194 = vadd.f32 %v69, %v193
    %v195 = vpop.f32.mrb[0].mxu0
    %196 = vdwg.mxu0
    %v197 = vmax.f32 %v164, 0.0
    %v198 = vmax.f32 %v169, 0.0
    %v199 = vmax.f32 %v174, 0.0
    %v200 = vmax.f32 %v179, 0.0
    %v201 = vmax.f32 %v184, 0.0
    %v202 = vmax.f32 %v189, 0.0
    %v203 = vmax.f32 %v194, 0.0
    %v204 = vld [vmem:[%s3] sm:$0x3]
    %v205 = vld [vmem:[%s4] sm:$0x3]
    %207 = vset.pattern.permute.xlu0 0
    %208 = vperm.xlu0 %207, %v205
    %v209 = vpop.permute.xlu0 %208
    %vm211 = vcmask 408576
    %v213 = vsel %vm211, %v204, 0
    %vm215 = vcmask 1041408
    %v217 = vsel %vm215, %v203, 0
    %219 = vmatprep.subr.mxu0 0.0
    %220 = vmatpush1.msra.mxu0 %v197
    %221 = vmatprep.subr.mxu0 0.0
    %222 = vmatpush1.msra.mxu0 %v198
    %223 = vmatprep.subr.mxu0 0.0
    %224 = vmatpush1.msra.mxu0 %v199
    %225 = vmatprep.subr.mxu0 0.0
    %226 = vmatpush1.msra.mxu0 %v200
    %227 = vmatprep.subr.mxu0 0.0
    %228 = vmatpush1.msra.mxu0 %v201
    %229 = vmatprep.subr.mxu0 0.0
    %230 = vmatpush1.msra.mxu0 %v202
    %231 = vmatprep.subr.mxu0 0.0
    %232 = vmatpush1.msra.mxu0 %v217
    %233 = vmatprep.subr.mxu0 0.0
    %234 = vmatpush1.msra.mxu0 0.0
    %235 = vmatprep.subr.mxu0 0.0
    %236 = vmatpush1.msra.mxu0 0.0
    %237 = vmatprep.subr.mxu0 0.0
    %238 = vmatpush1.msra.mxu0 0.0
    %239 = vmatprep.subr.mxu0 0.0
    %240 = vmatpush1.msra.mxu0 0.0
    %241 = vmatprep.subr.mxu0 0.0
    %242 = vmatpush1.msra.mxu0 0.0
    %243 = vmatprep.subr.mxu0 0.0
    %244 = vmatpush1.msra.mxu0 0.0
    %245 = vmatprep.subr.mxu0 0.0
    %246 = vmatpush1.msra.mxu0 0.0
    %247 = vmatprep.subr.mxu0 0.0
    %248 = vmatpush1.msra.mxu0 0.0
    %249 = vmatprep.subr.mxu0 0.0
    %250 = vmatpush1.msra.mxu0 0.0
    %251 = vmatprep.subr.mxu0 0.0
    %252 = vmatpush1.msra.mxu0 0.0
    %253 = vmatprep.subr.mxu0 0.0
    %254 = vmatpush1.msra.mxu0 0.0
    %255 = vmatprep.subr.mxu0 0.0
    %256 = vmatpush1.msra.mxu0 0.0
    %257 = vmatprep.subr.mxu0 0.0
    %258 = vmatpush1.msra.mxu0 0.0
    %259 = vmatprep.subr.mxu0 0.0
    %260 = vmatpush1.msra.mxu0 0.0
    %261 = vmatprep.subr.mxu0 0.0
    %262 = vmatpush1.msra.mxu0 0.0
    %263 = vmatprep.subr.mxu0 0.0
    %264 = vmatpush1.msra.mxu0 0.0
    %265 = vmatprep.subr.mxu0 0.0
    %266 = vmatpush1.msra.mxu0 0.0
    %267 = vmatprep.subr.mxu0 0.0
    %268 = vmatpush1.msra.mxu0 0.0
    %269 = vmatprep.subr.mxu0 0.0
    %270 = vmatpush1.msra.mxu0 0.0
    %271 = vmatprep.subr.mxu0 0.0
    %272 = vmatpush1.msra.mxu0 0.0
    %273 = vmatprep.subr.mxu0 0.0
    %274 = vmatpush1.msra.mxu0 0.0
    %275 = vmatprep.subr.mxu0 0.0
    %276 = vmatpush1.msra.mxu0 0.0
    %277 = vmatprep.subr.mxu0 0.0
    %278 = vmatpush1.msra.mxu0 0.0
    %279 = vmatprep.subr.mxu0 0.0
    %280 = vmatpush1.msra.mxu0 0.0
    %281 = vmatprep.subr.mxu0 0.0
    %282 = vmatpush1.msra.mxu0 0.0
    %283 = vmatprep.mubr.f32.mxu0 0.0
    %284 = vmatmul.mubr.f32.gmra.mrb[0].mxu0 %v213
    %v285 = vpop.f32.mrb[0].mxu0
    %v286 = vadd.f32 %v209, %v285
    %v287 = vpop.f32.mrb[0].mxu0
    %288 = vdwg.mxu0
    %289 = vst [vmem:[#allocation2] sm:$0x3] %v286
    // Predicated region
    $region22: #{tpu_custom_call.1} parent=1 // pred_check
      _
    $region23: #{tpu_custom_call.1} parent=1 // pred_check_branch
      %291 = sbr.rel (0) target = $region25
    $region24: #{tpu_custom_call.1} parent=1 // pred_region
      %s293 = ssub.s32 32, 32
      %294 = vsyncadd [#allocation3], %s293
      %s296 = sshll.u32 [#allocation2], 4
      %s297 = int_to_ptr.vmem [resolvable:$true] %s296
      %299 = dma.vmem_to_hbm [thread:$0]  %s297, 32, %s5, [#allocation3]
    $region25: #{tpu_custom_call.1} parent=1 // pred_fallthru
      _
    // Predicated region
    $region26: #{tpu_custom_call.1} parent=1 // pred_check
      _
    $region27: #{tpu_custom_call.1} parent=1 // pred_check_branch
      %301 = sbr.rel (0) target = $region29
    $region28: #{tpu_custom_call.1} parent=1 // pred_region
      %302 = dma.done [#allocation3], 32
    $region29: #{tpu_custom_call.1} parent=1 // pred_fallthru
      _
    %303 = vsyncpa [#allocation3], 1

</llo_original>
